<compile_context>
chip_gen: v7x
topology: tpu7x:2x2x1
jax: 0.10.0
libtpu: 0.0.40
codegen_flags: <defaults>
</compile_context>

<pallas_src>
import functools
from typing import NamedTuple

import jax
import jax.numpy as jnp
from jax import lax
from jax.experimental import pallas as pl
from jax.experimental.pallas import tpu as pltpu


def _round_up(x, m):
    return (x + m - 1) // m * m


def _chip_kind():
    try:
        return jax.devices()[0].device_kind.lower()
    except Exception:
        return ""


def _default_tiles():
    """(tn, tv) defaults per chip family (see review rooflines)."""
    kind = _chip_kind()
    if "v6" in kind:
        return 1024, 2048        # v6e: needs ~680 flops/byte to be MXU-bound
    if "v7" in kind or "7x" in kind:
        return 512, 1024         # v7x: ~310 flops/byte; keep >=2 token blocks
    return 512, 1024             # v5e (crossover ~240) and fallback


# ----------------------------------------------------------------------------
# One-time LM-head preparation (hoisted out of the per-step forward)
# ----------------------------------------------------------------------------
class PreparedLMHead(NamedTuple):
    w: jax.Array        # (d_pad, v_pad) bf16, zero-padded
    d_orig: int
    v_orig: int
    tv: int


def prepare_lm_head(w_lm, *, tv=None):
    """Pad (D, V) to TPU tile multiples and cast to bf16. Call at init / param
    setup, NOT per forward — removes the per-call full-weight HBM copy."""
    d, v = w_lm.shape
    if tv is None:
        _, tv = _default_tiles()
    d_pad = _round_up(d, 128)
    tv = max(128, min(_round_up(tv, 128), _round_up(v, 128)))
    v_pad = _round_up(v, tv)
    w = w_lm
    if d_pad != d or v_pad != v:
        # Padded vocab columns are zeros -> logit 0. The kernel keeps an
        # in-kernel mask on the LAST vocab tile so those columns never pollute
        # the logsumexp (see correctness note in the review).
        w = jnp.pad(w, ((0, d_pad - d), (0, v_pad - v)))
    return PreparedLMHead(w=w.astype(jnp.bfloat16), d_orig=d, v_orig=v, tv=tv)


# ----------------------------------------------------------------------------
# Fused LM-head + cross-entropy kernel (online logsumexp over vocab tiles)
# ----------------------------------------------------------------------------
def _lmhead_ce_kernel(h_ref, w_ref, lbl_ref, nll_ref, m_sc, l_sc, tgt_sc,
                      *, tv, valid_cols_last, mask_last_tile):
    k = pl.program_id(1)          # vocab (reduction) axis — last grid axis

    @pl.when(k == 0)
    def _():
        m_sc[...] = jnp.full_like(m_sc, -jnp.inf)
        l_sc[...] = jnp.zeros_like(l_sc)
        tgt_sc[...] = jnp.zeros_like(tgt_sc)

    # (tn, D) @ (D, tv) on the MXU; bf16 inputs, f32 accumulation.
    logits = jnp.dot(h_ref[...], w_ref[...], preferred_element_type=jnp.float32)

    # One tile-local iota, reused for the padding mask and the label gather.
    local_col = lax.broadcasted_iota(jnp.int32, logits.shape, 1)

    if mask_last_tile:
        # Only the last vocab tile contains padded columns; mask them there
        # only (compare+select is elided on the other ~99% of tiles).
        def _mask(lg):
            return jnp.where(local_col < valid_cols_last, lg,
                             jnp.float32(-1e30))
        logits = lax.cond(k == pl.num_programs(1) - 1, _mask,
                          lambda lg: lg, logits)

    # Online logsumexp over the vocab axis (all state in f32).
    m_prev = m_sc[...]
    m_new = jnp.maximum(m_prev, logits.max(axis=-1, keepdims=True))
    alpha = jnp.exp(m_prev - m_new)
    l_sc[...] = alpha * l_sc[...] + jnp.exp(logits - m_new).sum(axis=-1,
                                                                keepdims=True)
    m_sc[...] = m_new

    # Target-logit gather: compare against the tile-local label offset.
    # Labels outside this tile (including ignore-index -100) never match.
    lbl_local = lbl_ref[...] - k * tv                       # (tn, 1) int32
    tgt_sc[...] += jnp.where(local_col == lbl_local, logits, 0.0).sum(
        axis=-1, keepdims=True)

    @pl.when(k == pl.num_programs(1) - 1)
    def _():
        # per-token NLL = logsumexp(logits) - logit[label]
        nll_ref[...] = (m_sc[...] + jnp.log(l_sc[...])) - tgt_sc[...]


def lmhead_cross_entropy(hidden, lm_head, labels, *, tn=None):
    """hidden: (N, D), lm_head: PreparedLMHead (or raw f32 (D, V) — compat
    path that pads/casts per call), labels: (N,) int -> per-token NLL (N,).

    Rows with label == -100 get nll == logsumexp(logits) (their target term is
    0); callers must mask them, as HF CrossEntropyLoss(ignore_index=-100) does.
    """
    if not isinstance(lm_head, PreparedLMHead):
        lm_head = prepare_lm_head(lm_head)     # slow compat path

    n, d = hidden.shape
    assert d == lm_head.d_orig
    d_pad, v_pad = lm_head.w.shape
    v = lm_head.v_orig
    tv = lm_head.tv

    # --- token tile ---------------------------------------------------------
    if tn is None:
        tn, _ = _default_tiles()
    n_min_pad = _round_up(n, 8)
    tn = max(8, min(_round_up(tn, 8), n_min_pad))
    # v7x megacore: keep >= 2 parallel token blocks when each block still has
    # enough arithmetic intensity (>= ~256 tokens) to stay near the roofline.
    if tn >= n_min_pad and n_min_pad >= 512:
        tn = _round_up((n_min_pad + 1) // 2, 8)
    n_pad = _round_up(n, tn)

    h = hidden
    if d_pad != d:
        h = jnp.pad(h, ((0, 0), (0, d_pad - d)))
    labels2d = labels.reshape(n, 1).astype(jnp.int32)
    if n_pad != n:
        h = jnp.pad(h, ((0, n_pad - n), (0, 0)))
        labels2d = jnp.pad(labels2d, ((0, n_pad - n), (0, 0)),
                           constant_values=-100)
    # Activations are small; cast per call. The big (D, V) weight is already
    # bf16 + padded (done once at init).
    h = h.astype(jnp.bfloat16)

    n_blocks = n_pad // tn
    v_blocks = v_pad // tv
    valid_cols_last = v - (v_blocks - 1) * tv

    # VMEM budget: bf16 I/O double buffers + the f32 (tn, tv) logits tile with
    # headroom for exp/where temporaries + lane-padded (tn,1)->(tn,128) small
    # buffers, capped below the chip's physical VMEM (v7x has only 64 MiB).
    kind = _chip_kind()
    vmem_needed = (2 * tn * d_pad * 2            # hidden double buffer (bf16)
                   + 2 * d_pad * tv * 2          # weight double buffer (bf16)
                   + 3 * tn * tv * 4             # f32 logits + temporaries
                   + 7 * tn * 128 * 4            # labels/out/scratch, lane-padded
                   + (2 << 20))                  # margin
    vmem_cap = (96 << 20) if ("v5" in kind or "v6" in kind) else (48 << 20)
    vmem_bytes = int(min(max(vmem_needed, 16 << 20), vmem_cap))

    cost = pl.CostEstimate(
        flops=2 * n_pad * d_pad * v_pad,
        transcendentals=n_pad * v_pad + n_pad,
        # W is re-streamed once per token block (n_blocks x); hidden once per
        # token block; labels + nll output are small.
        bytes_accessed=(n_blocks * d_pad * v_pad * 2
                        + n_pad * d_pad * 2 + n_pad * 8),
    )

    kernel = functools.partial(_lmhead_ce_kernel, tv=tv,
                               valid_cols_last=valid_cols_last,
                               mask_last_tile=(v_pad != v))
    nll = pl.pallas_call(
        kernel,
        out_shape=jax.ShapeDtypeStruct((n_pad, 1), jnp.float32),
        grid_spec=pltpu.PrefetchScalarGridSpec(
            num_scalar_prefetch=0,
            grid=(n_blocks, v_blocks),            # token blocks x vocab tiles
            in_specs=[
                pl.BlockSpec((tn, d_pad), lambda i, k: (i, 0)),   # hidden block
                pl.BlockSpec((d_pad, tv), lambda i, k: (0, k)),   # LM-head tile
                pl.BlockSpec((tn, 1), lambda i, k: (i, 0)),       # labels block
            ],
            out_specs=pl.BlockSpec((tn, 1), lambda i, k: (i, 0)),
            scratch_shapes=[pltpu.VMEM((tn, 1), jnp.float32)] * 3,
        ),
        compiler_params=pltpu.CompilerParams(
            dimension_semantics=("parallel", "arbitrary"),
            vmem_limit_bytes=vmem_bytes,
        ),
        cost_estimate=cost,
    )(h, lm_head.w, labels2d)
    return nll[:n, 0]


# ----------------------------------------------------------------------------
# Tiny deterministic "BART" stub (glue, plain JAX) + forward
# ----------------------------------------------------------------------------
def init_params(key, vocab_size, d_model, *, tv=None):
    k_emb, k_lm = jax.random.split(key)
    w_lm = jax.random.normal(k_lm, (d_model, vocab_size), jnp.float32) * 0.02
    return {
        "embed": jax.random.normal(k_emb, (vocab_size, d_model),
                                   jnp.float32) * 0.02,
        "w_lm": w_lm,                               # f32 master copy (reference)
        "lm_head": prepare_lm_head(w_lm, tv=tv),    # padded bf16, kernel input
        # TODO(synk): BART's final_logits_bias is all-zeros at init; omitted.
    }


def _stub_hidden(params, src_input, src_mask, tgt_input):
    # TODO(synk): the pretrained BART encoder/decoder stack is not
    # reimplemented; a tiny deterministic stub produces the decoder hidden
    # states that feed the (Pallas) LM head + CE loss.
    src_emb = params["embed"][src_input]                          # (B, S, D)
    mask = src_mask.astype(src_emb.dtype)[..., None]              # (B, S, 1)
    enc = (src_emb * mask).sum(axis=1) / jnp.maximum(mask.sum(axis=1), 1.0)
    dec_emb = params["embed"][tgt_input]                          # (B, T, D)
    return jnp.tanh(dec_emb + enc[:, None, :])                    # (B, T, D)


def generator_forward(params, src_input, src_mask, tgt_input, tgt_output,
                      *, tn=None):
    """Mirrors Generator.forward: returns the scalar cross-entropy loss."""
    hidden = _stub_hidden(params, src_input, src_mask, tgt_input)
    b, t, d = hidden.shape
    hidden_flat = hidden.reshape(b * t, d)
    labels_flat = tgt_output.reshape(b * t)

    # --- Pallas hot path: LM head matmul + log-softmax CE -------------------
    nll = lmhead_cross_entropy(hidden_flat, params["lm_head"], labels_flat,
                               tn=tn)                              # (N,)

    # HF CrossEntropyLoss default: mean over tokens with label != -100.
    valid = (labels_flat != -100).astype(jnp.float32)
    loss = jnp.sum(nll * valid) / jnp.maximum(jnp.sum(valid), 1.0)
    return loss


def reference_forward(params, src_input, src_mask, tgt_input, tgt_output,
                      *, bf16_matmul=True):
    hidden = _stub_hidden(params, src_input, src_mask, tgt_input)
    h_flat = hidden.reshape(-1, hidden.shape[-1])
    if bf16_matmul:
        logits = jnp.dot(h_flat.astype(jnp.bfloat16),
                         params["w_lm"].astype(jnp.bfloat16),
                         preferred_element_type=jnp.float32)
    else:
        logits = jnp.dot(h_flat, params["w_lm"])
    logp = jax.nn.log_softmax(logits, axis=-1)
    labels_flat = tgt_output.reshape(-1)
    safe = jnp.where(labels_flat == -100, 0, labels_flat)
    tgt_lp = jnp.take_along_axis(logp, safe[:, None], axis=-1)[:, 0]
    valid = (labels_flat != -100).astype(jnp.float32)
    return -jnp.sum(tgt_lp * valid) / jnp.maximum(jnp.sum(valid), 1.0)


if __name__ == "__main__":
    VOCAB = 1000      # deliberately NOT a tile multiple -> exercises padding/mask
    D_MODEL = 128
    BATCH = 4
    SRC_LEN = 8
    TGT_LEN = 16
    PAD_ID = 1        # BART pad_token_id (unused by the loss path here)

    key = jax.random.PRNGKey(0)
    k_params, k_src, k_tgt = jax.random.split(key, 3)

    # tv=512 so the demo vocab (1000 -> padded 1024) exercises BOTH the
    # multi-tile online-logsumexp reduction AND the last-tile padding mask.
    params = init_params(k_params, VOCAB, D_MODEL, tv=512)

    src_input = jax.random.randint(k_src, (BATCH, SRC_LEN), 0, VOCAB,
                                   dtype=jnp.int32)
    src_mask = jnp.ones((BATCH, SRC_LEN), dtype=jnp.int32)
    tgt_full = jax.random.randint(k_tgt, (BATCH, TGT_LEN + 1), 0, VOCAB,
                                  dtype=jnp.int32)
    tgt_input = tgt_full[:, :-1]
    tgt_output = tgt_full[:, 1:]
    # exercise the ignore-index (-100) path like HF CrossEntropyLoss
    tgt_output = tgt_output.at[0, 0].set(-100)

    # small tn so the demo exercises multiple parallel token blocks
    # (N = 4*16 = 64 tokens -> 2 token blocks x 2 vocab tiles).
    loss = generator_forward(params, src_input, src_mask, tgt_input,
                             tgt_output, tn=32)
    loss = jax.block_until_ready(loss)

    ref_bf16 = reference_forward(params, src_input, src_mask, tgt_input,
                                 tgt_output, bf16_matmul=True)
    ref_f32 = reference_forward(params, src_input, src_mask, tgt_input,
                                tgt_output, bf16_matmul=False)

    assert jnp.allclose(loss, ref_bf16, rtol=1e-4, atol=1e-4), (loss, ref_bf16)
    assert jnp.allclose(loss, ref_f32, rtol=2e-2, atol=2e-2), (loss, ref_f32)

    print("KERNEL_OK")
</pallas_src>

<mosaic_0001>
module attributes {stable_mosaic.version = 11 : i64} {
  func.func @_lmhead_ce_kernel(%arg0: i32, %arg1: i32, %arg2: memref<32x128xbf16, #tpu.memory_space<vmem>>, %arg3: memref<128x512xbf16, #tpu.memory_space<vmem>>, %arg4: memref<32x1xi32, #tpu.memory_space<vmem>>, %arg5: memref<32x1xf32, #tpu.memory_space<vmem>>, %arg6: memref<32x1xf32, #tpu.memory_space<vmem>>, %arg7: memref<32x1xf32, #tpu.memory_space<vmem>>, %arg8: memref<32x1xf32, #tpu.memory_space<vmem>>) attributes {dimension_semantics = [#tpu.dimension_semantics<parallel>, #tpu.dimension_semantics<arbitrary>], iteration_bounds = array<i64: 2, 2>, scalar_prefetch = 0 : i64, scratch_operands = 3 : i64, tpu.core_type = #tpu.core_type<tc>, window_params = [{transform_indices = @transform_0, window_bounds = array<i64: 32, 128>}, {transform_indices = @transform_1, window_bounds = array<i64: 128, 512>}, {transform_indices = @transform_2, window_bounds = array<i64: 32, 1>}, {transform_indices = @transform_3, window_bounds = array<i64: 32, 1>}]} {
    %c0_i32 = arith.constant 0 : i32
    %0 = arith.cmpi eq, %arg1, %c0_i32 : i32
    %1 = arith.extui %0 : i1 to i32
    %c0_i32_0 = arith.constant 0 : i32
    %2 = arith.cmpi ne, %1, %c0_i32_0 : i32
    scf.if %2 {
      %cst_25 = arith.constant 0xFF800000 : f32
      %43 = vector.broadcast %cst_25 : f32 to vector<32x1xf32>
      %c0_26 = arith.constant 0 : index
      %c0_27 = arith.constant 0 : index
      %44 = vector.load %arg6[%c0_26, %c0_27] : memref<32x1xf32, #tpu.memory_space<vmem>>, vector<32x1xf32>
      tpu.vector_store %arg6[%c0_26, %c0_27], %43 {strides = array<i32>} : memref<32x1xf32, #tpu.memory_space<vmem>>, vector<32x1xf32>,
      %cst_28 = arith.constant 0.000000e+00 : f32
      %45 = vector.broadcast %cst_28 : f32 to vector<32x1xf32>
      %c0_29 = arith.constant 0 : index
      %c0_30 = arith.constant 0 : index
      %46 = vector.load %arg7[%c0_29, %c0_30] : memref<32x1xf32, #tpu.memory_space<vmem>>, vector<32x1xf32>
      tpu.vector_store %arg7[%c0_29, %c0_30], %45 {strides = array<i32>} : memref<32x1xf32, #tpu.memory_space<vmem>>, vector<32x1xf32>,
      %cst_31 = arith.constant 0.000000e+00 : f32
      %47 = vector.broadcast %cst_31 : f32 to vector<32x1xf32>
      %c0_32 = arith.constant 0 : index
      %c0_33 = arith.constant 0 : index
      %48 = vector.load %arg8[%c0_32, %c0_33] : memref<32x1xf32, #tpu.memory_space<vmem>>, vector<32x1xf32>
      tpu.vector_store %arg8[%c0_32, %c0_33], %47 {strides = array<i32>} : memref<32x1xf32, #tpu.memory_space<vmem>>, vector<32x1xf32>,
    } else {
    }
    %c0 = arith.constant 0 : index
    %c0_1 = arith.constant 0 : index
    %3 = vector.load %arg2[%c0, %c0_1] : memref<32x128xbf16, #tpu.memory_space<vmem>>, vector<32x128xbf16>
    %c0_2 = arith.constant 0 : index
    %c0_3 = arith.constant 0 : index
    %4 = vector.load %arg3[%c0_2, %c0_3] : memref<128x512xbf16, #tpu.memory_space<vmem>>, vector<128x512xbf16>
    %cst = arith.constant dense<0.000000e+00> : vector<32x512xf32>
    %5 = tpu.matmul %3, %4, %cst {dimension_numbers = #tpu.dot_dimension_numbers<[1], [0], [0], [1], [0, 0, 1, 1], [], []>} : vector<32x128xbf16>, vector<128x512xbf16>, vector<32x512xf32> -> vector<32x512xf32>
    %6 = tpu.iota {dimensions = array<i32: 1>} : vector<32x512xi32>
    %c1_i32 = arith.constant 1 : i32
    %7 = arith.cmpi eq, %arg1, %c1_i32 : i32
    %8 = arith.extui %7 : i1 to i32
    %c0_i32_4 = arith.constant 0 : i32
    %9 = arith.cmpi ne, %8, %c0_i32_4 : i32
    %10 = scf.if %9 -> (vector<32x512xf32>) {
      %c488_i32 = arith.constant 488 : i32
      %43 = vector.broadcast %c488_i32 : i32 to vector<32x512xi32>
      %44 = arith.cmpi slt, %6, %43 : vector<32x512xi32>
      %cst_25 = arith.constant -1.000000e+30 : f32
      %45 = vector.broadcast %cst_25 : f32 to vector<32x512xf32>
      %46 = arith.select %44, %5, %45 : vector<32x512xi1>, vector<32x512xf32>
      scf.yield %46 : vector<32x512xf32>
    } else {
      scf.yield %5 : vector<32x512xf32>
    }
    %c0_5 = arith.constant 0 : index
    %c0_6 = arith.constant 0 : index
    %11 = vector.load %arg6[%c0_5, %c0_6] : memref<32x1xf32, #tpu.memory_space<vmem>>, vector<32x1xf32>
    %cst_7 = arith.constant dense<0xFF800000> : vector<32xf32>
    %12 = vector.multi_reduction <maximumf>, %10, %cst_7 [1] : vector<32x512xf32> to vector<32xf32>
    %13 = vector.shape_cast %12 : vector<32xf32> to vector<32x1xf32>
    %14 = arith.maximumf %11, %13 : vector<32x1xf32>
    %15 = arith.subf %11, %14 : vector<32x1xf32>
    %16 = math.exp %15 : vector<32x1xf32>
    %c0_8 = arith.constant 0 : index
    %c0_9 = arith.constant 0 : index
    %17 = vector.load %arg7[%c0_8, %c0_9] : memref<32x1xf32, #tpu.memory_space<vmem>>, vector<32x1xf32>
    %18 = arith.mulf %16, %17 : vector<32x1xf32>
    %19 = vector.broadcast %14 : vector<32x1xf32> to vector<32x512xf32>
    %20 = arith.subf %10, %19 : vector<32x512xf32>
    %21 = math.exp %20 : vector<32x512xf32>
    %cst_10 = arith.constant dense<0.000000e+00> : vector<32xf32>
    %22 = vector.multi_reduction <add>, %21, %cst_10 [1] : vector<32x512xf32> to vector<32xf32>
    %23 = vector.shape_cast %22 : vector<32xf32> to vector<32x1xf32>
    %24 = arith.addf %18, %23 : vector<32x1xf32>
    %c0_11 = arith.constant 0 : index
    %c0_12 = arith.constant 0 : index
    %25 = vector.load %arg7[%c0_11, %c0_12] : memref<32x1xf32, #tpu.memory_space<vmem>>, vector<32x1xf32>
    tpu.vector_store %arg7[%c0_11, %c0_12], %24 {strides = array<i32>} : memref<32x1xf32, #tpu.memory_space<vmem>>, vector<32x1xf32>,
    %c0_13 = arith.constant 0 : index
    %c0_14 = arith.constant 0 : index
    %26 = vector.load %arg6[%c0_13, %c0_14] : memref<32x1xf32, #tpu.memory_space<vmem>>, vector<32x1xf32>
    tpu.vector_store %arg6[%c0_13, %c0_14], %14 {strides = array<i32>} : memref<32x1xf32, #tpu.memory_space<vmem>>, vector<32x1xf32>,
    %c0_15 = arith.constant 0 : index
    %c0_16 = arith.constant 0 : index
    %27 = vector.load %arg4[%c0_15, %c0_16] : memref<32x1xi32, #tpu.memory_space<vmem>>, vector<32x1xi32>
    %c512_i32 = arith.constant 512 : i32
    %28 = arith.muli %arg1, %c512_i32 : i32
    %29 = vector.broadcast %28 : i32 to vector<32x1xi32>
    %30 = arith.subi %27, %29 : vector<32x1xi32>
    %c0_17 = arith.constant 0 : index
    %c0_18 = arith.constant 0 : index
    %31 = vector.load %arg8[%c0_17, %c0_18] : memref<32x1xf32, #tpu.memory_space<vmem>>, vector<32x1xf32>
    %32 = vector.broadcast %30 : vector<32x1xi32> to vector<32x512xi32>
    %33 = arith.cmpi eq, %6, %32 : vector<32x512xi32>
    %cst_19 = arith.constant 0.000000e+00 : f32
    %34 = vector.broadcast %cst_19 : f32 to vector<32x512xf32>
    %35 = arith.select %33, %10, %34 : vector<32x512xi1>, vector<32x512xf32>
    %cst_20 = arith.constant dense<0.000000e+00> : vector<32xf32>
    %36 = vector.multi_reduction <add>, %35, %cst_20 [1] : vector<32x512xf32> to vector<32xf32>
    %37 = vector.shape_cast %36 : vector<32xf32> to vector<32x1xf32>
    %38 = arith.addf %31, %37 : vector<32x1xf32>
    %c0_21 = arith.constant 0 : index
    %c0_22 = arith.constant 0 : index
    %39 = vector.load %arg8[%c0_21, %c0_22] : memref<32x1xf32, #tpu.memory_space<vmem>>, vector<32x1xf32>
    tpu.vector_store %arg8[%c0_21, %c0_22], %38 {strides = array<i32>} : memref<32x1xf32, #tpu.memory_space<vmem>>, vector<32x1xf32>,
    %c1_i32_23 = arith.constant 1 : i32
    %40 = arith.cmpi eq, %arg1, %c1_i32_23 : i32
    %41 = arith.extui %40 : i1 to i32
    %c0_i32_24 = arith.constant 0 : i32
    %42 = arith.cmpi ne, %41, %c0_i32_24 : i32
    scf.if %42 {
      %c0_25 = arith.constant 0 : index
      %c0_26 = arith.constant 0 : index
      %43 = vector.load %arg6[%c0_25, %c0_26] : memref<32x1xf32, #tpu.memory_space<vmem>>, vector<32x1xf32>
      %c0_27 = arith.constant 0 : index
      %c0_28 = arith.constant 0 : index
      %44 = vector.load %arg7[%c0_27, %c0_28] : memref<32x1xf32, #tpu.memory_space<vmem>>, vector<32x1xf32>
      %45 = math.log %44 : vector<32x1xf32>
      %46 = arith.addf %43, %45 : vector<32x1xf32>
      %c0_29 = arith.constant 0 : index
      %c0_30 = arith.constant 0 : index
      %47 = vector.load %arg8[%c0_29, %c0_30] : memref<32x1xf32, #tpu.memory_space<vmem>>, vector<32x1xf32>
      %48 = arith.subf %46, %47 : vector<32x1xf32>
      %c0_31 = arith.constant 0 : index
      %c0_32 = arith.constant 0 : index
      %49 = vector.load %arg5[%c0_31, %c0_32] : memref<32x1xf32, #tpu.memory_space<vmem>>, vector<32x1xf32>
      tpu.vector_store %arg5[%c0_31, %c0_32], %48 {strides = array<i32>} : memref<32x1xf32, #tpu.memory_space<vmem>>, vector<32x1xf32>,
    } else {
    }
    return
  }
  func.func @transform_0(%arg0: i32, %arg1: i32) -> (i32, i32) {
    %c0_i32 = arith.constant 0 : i32
    %c0_i32_0 = arith.constant 0 : i32
    return %arg0, %c0_i32 : i32, i32
  }
  func.func @transform_1(%arg0: i32, %arg1: i32) -> (i32, i32) {
    %c0_i32 = arith.constant 0 : i32
    %c0_i32_0 = arith.constant 0 : i32
    return %c0_i32, %arg1 : i32, i32
  }
  func.func @transform_2(%arg0: i32, %arg1: i32) -> (i32, i32) {
    %c0_i32 = arith.constant 0 : i32
    %c0_i32_0 = arith.constant 0 : i32
    return %arg0, %c0_i32 : i32, i32
  }
  func.func @transform_3(%arg0: i32, %arg1: i32) -> (i32, i32) {
    %c0_i32 = arith.constant 0 : i32
    %c0_i32_0 = arith.constant 0 : i32
    return %arg0, %c0_i32 : i32, i32
  }
}

</mosaic_0001>

<llo_original>
// kernel: tpu_custom_call.1
$region0: #{tpu_custom_call.1}
  #allocation0 [shape = 'u32[]', space=smem, size = 0x4, offset = 0x4, fixed_abs, tag = 'smem constant byte address 0x4 - core index']
  #allocation1 [shape = 'u32[144,128]{1,0:T(1,128)}', space=vmem, size = 0x12000, scoped, tag = 'internal scratch']
  #allocation2 [shape = 'f32[32,1]{1,0:T(8,128)}', space=vmem, size = 0x4000, scoped, tag = 'scratch operand']
  #allocation3 [shape = 'f32[32,1]{1,0:T(8,128)}', space=vmem, size = 0x4000, scoped, tag = 'scratch operand']
  #allocation4 [shape = 'f32[32,1]{1,0:T(8,128)}', space=vmem, size = 0x4000, scoped, tag = 'scratch operand']
  %s0 = inlined_call_operand.vmem [shape: bf16[64,128], index: 0, kind: input, shape index: {}]
  %s1 = inlined_call_operand.hbm [shape: bf16[128,1024], index: 1, kind: input, shape index: {}]
  %s2 = inlined_call_operand.vmem [shape: s32[64,1], index: 2, kind: input, shape index: {}]
  %s3 = inlined_call_operand.vmem [shape: f32[64,1], index: 3, kind: output, shape index: {}]
  %s4 = sld [smem:[#allocation0]]
  $region65: #{tpu_custom_call.1} parent=0
    _
  %s6 = ssub.s32 1, %s4
  %s7 = scalar_select 0, %s6, %s4
  $region1: #{tpu_custom_call.1} parent=0
    #allocation5 [shape = 'u8[262144]{0}', space=vmem, size = 0x40000, scoped, tag = 'input window, operand 1']
    #allocation6 [shape = 's32[2]{0}', space=sflag, size = 0x8, scoped, tag = 'scoped memory for tpu_custom_call.1']
    %8 = vsyncpa [#allocation6], 0
    %s9 = scalar_lea.sflag [#allocation6], 1
    %10 = vsyncpa %s9, 0
    loop: start=0, step=1, limit=6
    $region2: #{tpu_custom_call.1} parent=1 // loop_pre_header
      _
    $region3: #{tpu_custom_call.1} parent=1 // loop_header
      %s12 = sphi 0, %s16
      %p13 = scmp.ge.s32.totalorder %s12, 6
      %s19 = sphi 0, %s31
      %s20 = sphi 0, %s27
      %s21 = sphi 0, %s19
      %s22 = sphi 0, %s20
      %s23 = sphi 0, %s21
      %s24 = sphi 0, %s22
      %s34 = sphi 0, %s36
      %s37 = sphi 0, %s34
      %s38 = sphi 0, %s37
      %s54 = sphi 0, %s38
      %s60 = sphi 0, %s62
      %s63 = sphi 0, %s60
      %s64 = sphi 0, %s63
      %s80 = sphi 0, %s64
      %s86 = sphi 0, %s88
      %s89 = sphi 0, %s86
      %s90 = sphi 0, %s89
      %s106 = sphi 0, %s90
      %s112 = sphi 0, %s114
      %s115 = sphi 0, %s112
      %s116 = sphi 0, %s115
      %s132 = sphi 0, %s116
    $region4: #{tpu_custom_call.1} parent=1 // loop_header_branch
      %15 = sbr.rel (%p13) target = $region8
    $region5: #{tpu_custom_call.1} parent=1 // loop_body
      %s17 = ssub.s32 %s12, 1
      %s18 = ssub.s32 %s12, 2
      %s25 = sadd.s32 1, %s20
      %p26 = scmp.ge.s32.totalorder %s25, 2
      %s27 = scalar_select %p26, 0, %s25
      %s28 = sadd.s32 1, %s19
      %s29 = scalar_select %p26, %s28, %s19
      %p30 = scmp.ge.s32.totalorder %s29, 2
      %s31 = scalar_select %p30, 0, %s29
      %s32 = ssub.s32 %s19, %s31
      %p33 = scmp.eq.s32.totalorder %s32, 0
      %s35 = sadd.s32 %s34, 1
      %s36 = scalar_select %p33, %s34, %s35
      %p39 = pneg %p33
      %p40 = scmp.eq.s32.totalorder %s12, 3
      %p41 = por %p39, %p40
      %p42 = scmp.ne.s32.totalorder %s34, %s37
      %p43 = scmp.eq.s32.totalorder %s12, 0
      %p44 = por %p42, %p43
      %p45 = scmp.ne.s32.totalorder %s34, %s37
      %p46 = scmp.eq.s32.totalorder %s17, 3
      %p47 = por %p45, %p46
      %p48 = scmp.ne.s32.totalorder %s37, %s38
      %p49 = scmp.eq.s32.totalorder %s17, 0
      %p50 = por %p48, %p49
      %p51 = scmp.ne.s32.totalorder %s37, %s38
      %p52 = scmp.eq.s32.totalorder %s18, 3
      %p53 = por %p51, %p52
      %p55 = scmp.ne.s32.totalorder %s38, %s54
      %p56 = scmp.eq.s32.totalorder %s18, 0
      %p57 = por %p55, %p56
      %s58 = ssub.s32 %s20, %s27
      %p59 = scmp.eq.s32.totalorder %s58, 0
      %s61 = sadd.s32 %s60, 1
      %s62 = scalar_select %p59, %s60, %s61
      %p65 = pneg %p59
      %p66 = scmp.eq.s32.totalorder %s12, 3
      %p67 = por %p65, %p66
      %p68 = scmp.ne.s32.totalorder %s60, %s63
      %p69 = scmp.eq.s32.totalorder %s12, 0
      %p70 = por %p68, %p69
      %p71 = scmp.ne.s32.totalorder %s60, %s63
      %p72 = scmp.eq.s32.totalorder %s17, 3
      %p73 = por %p71, %p72
      %p74 = scmp.ne.s32.totalorder %s63, %s64
      %p75 = scmp.eq.s32.totalorder %s17, 0
      %p76 = por %p74, %p75
      %p77 = scmp.ne.s32.totalorder %s63, %s64
      %p78 = scmp.eq.s32.totalorder %s18, 3
      %p79 = por %p77, %p78
      %p81 = scmp.ne.s32.totalorder %s64, %s80
      %p82 = scmp.eq.s32.totalorder %s18, 0
      %p83 = por %p81, %p82
      %s84 = ssub.s32 %s19, %s31
      %p85 = scmp.eq.s32.totalorder %s84, 0
      %s87 = sadd.s32 %s86, 1
      %s88 = scalar_select %p85, %s86, %s87
      %p91 = pneg %p85
      %p92 = scmp.eq.s32.totalorder %s12, 3
      %p93 = por %p91, %p92
      %p94 = scmp.ne.s32.totalorder %s86, %s89
      %p95 = scmp.eq.s32.totalorder %s12, 0
      %p96 = por %p94, %p95
      %p97 = scmp.ne.s32.totalorder %s86, %s89
      %p98 = scmp.eq.s32.totalorder %s17, 3
      %p99 = por %p97, %p98
      %p100 = scmp.ne.s32.totalorder %s89, %s90
      %p101 = scmp.eq.s32.totalorder %s17, 0
      %p102 = por %p100, %p101
      %p103 = scmp.ne.s32.totalorder %s89, %s90
      %p104 = scmp.eq.s32.totalorder %s18, 3
      %p105 = por %p103, %p104
      %p107 = scmp.ne.s32.totalorder %s90, %s106
      %p108 = scmp.eq.s32.totalorder %s18, 0
      %p109 = por %p107, %p108
      %s110 = ssub.s32 %s19, %s31
      %p111 = scmp.eq.s32.totalorder %s110, 0
      %s113 = sadd.s32 %s112, 1
      %s114 = scalar_select %p111, %s112, %s113
      %p117 = pneg %p111
      %p118 = scmp.eq.s32.totalorder %s12, 3
      %p119 = por %p117, %p118
      %p120 = scmp.ne.s32.totalorder %s112, %s115
      %p121 = scmp.eq.s32.totalorder %s12, 0
      %p122 = por %p120, %p121
      %p123 = scmp.ne.s32.totalorder %s112, %s115
      %p124 = scmp.eq.s32.totalorder %s17, 3
      %p125 = por %p123, %p124
      %p126 = scmp.ne.s32.totalorder %s115, %s116
      %p127 = scmp.eq.s32.totalorder %s17, 0
      %p128 = por %p126, %p127
      %p129 = scmp.ne.s32.totalorder %s115, %s116
      %p130 = scmp.eq.s32.totalorder %s18, 3
      %p131 = por %p129, %p130
      %p133 = scmp.ne.s32.totalorder %s116, %s132
      %p134 = scmp.eq.s32.totalorder %s18, 0
      %p135 = por %p133, %p134
      %p136 = scmp.le.s32.totalorder 1, %s12
      %p137 = scmp.lt.s32.totalorder %s12, 5
      %p138 = pnand %p136, %p137
      %p139 = pneg %p138
      // Predicated region
      $region9: #{tpu_custom_call.1} parent=5 // pred_check
        _
      $region10: #{tpu_custom_call.1} parent=5 // pred_check_branch
        %141 = sbr.rel (%p138) target = $region12
      $region11: #{tpu_custom_call.1} parent=5 // pred_region
        %s142 = ssub.s32 %s12, 1
      $region12: #{tpu_custom_call.1} parent=5 // pred_fallthru
        _
      %p143 = scmp.lt.s32.totalorder %s12, 4
      // Predicated region
      $region13: #{tpu_custom_call.1} parent=5 // pred_check
        %p144 = pneg %p143
      $region14: #{tpu_custom_call.1} parent=5 // pred_check_branch
        %146 = sbr.rel (%p144) target = $region16
      $region15: #{tpu_custom_call.1} parent=5 // pred_region
        // Predicated region
        $region17: #{tpu_custom_call.1} parent=15 // pred_check
          %p147 = pneg %p44
        $region18: #{tpu_custom_call.1} parent=15 // pred_check_branch
          %149 = sbr.rel (%p147) target = $region20
        $region19: #{tpu_custom_call.1} parent=15 // pred_region
          %s150 = smul.u32 4, %s19
          %p151 = scmp.lt.s32.totalorder %s150, 7
          %s152 = scalar_select %p151, %s150, 7
          %s153 = smul.addr %s152, 4
          %s154 = scalar_lea.vmem %s0, %s153
          %s155 = smul.u32 4, %s19
        $region20: #{tpu_custom_call.1} parent=15 // pred_fallthru
          _
        // Predicated region
        $region21: #{tpu_custom_call.1} parent=15 // pred_check
          %p156 = pneg %p70
        $region22: #{tpu_custom_call.1} parent=15 // pred_check_branch
          %158 = sbr.rel (%p156) target = $region24
        $region23: #{tpu_custom_call.1} parent=15 // pred_region
          %s159 = sand.u32 %s60, 1
          %s160 = scalar_lea.sflag [#allocation6], %s159
          %s161 = sand.u32 %s60, 1
          %s162 = smul.addr %s161, 256
          %s163 = scalar_lea.vmem [#allocation5], %s162
          %s164 = smul.u32 4, %s20
          %s166 = ssub.s32 4096, 4096
          %167 = vsyncadd %s160, %s166
          %s168 = smul.addr %s164, 64
          %s169 = scalar_lea.hbm %s1, %s168
          %s170 = sshll.u32 %s163, 4
          %s171 = int_to_ptr.vmem [resolvable:$true] %s170
          %176 = dma.hbm_to_vmem [thread:$0]  %s169, 4096, %s171, %s160, 512, 256, 16
        $region24: #{tpu_custom_call.1} parent=15 // pred_fallthru
          _
        // Predicated region
        $region25: #{tpu_custom_call.1} parent=15 // pred_check
          %p177 = pneg %p96
        $region26: #{tpu_custom_call.1} parent=15 // pred_check_branch
          %179 = sbr.rel (%p177) target = $region28
        $region27: #{tpu_custom_call.1} parent=15 // pred_region
          %s180 = smul.u32 4, %s19
          %p181 = scmp.lt.s32.totalorder %s180, 7
          %s182 = scalar_select %p181, %s180, 7
          %s183 = smul.addr %s182, 8
          %s184 = scalar_lea.vmem %s2, %s183
          %s185 = smul.u32 4, %s19
        $region28: #{tpu_custom_call.1} parent=15 // pred_fallthru
          _
      $region16: #{tpu_custom_call.1} parent=5 // pred_fallthru
        _
      %p186 = scmp.le.s32.totalorder 1, %s12
      %p187 = scmp.lt.s32.totalorder %s12, 5
      %p188 = pnand %p186, %p187
      %p189 = pneg %p188
      // Predicated region
      $region29: #{tpu_custom_call.1} parent=5 // pred_check
        _
      $region30: #{tpu_custom_call.1} parent=5 // pred_check_branch
        %191 = sbr.rel (%p188) target = $region32
      $region31: #{tpu_custom_call.1} parent=5 // pred_region
        %s192 = ssub.s32 %s12, 1
        %s193 = sand.u32 %s63, 1
        %s194 = scalar_lea.sflag [#allocation6], %s193
        %s195 = sand.u32 %s63, 1
        %s196 = smul.addr %s195, 256
        %s197 = scalar_lea.vmem [#allocation5], %s196
        // Predicated region
        $region33: #{tpu_custom_call.1} parent=31 // pred_check
          %p198 = pneg %p76
        $region34: #{tpu_custom_call.1} parent=31 // pred_check_branch
          %200 = sbr.rel (%p198) target = $region36
        $region35: #{tpu_custom_call.1} parent=31 // pred_region
          %201 = dma.done %s194, 4096
        $region36: #{tpu_custom_call.1} parent=31 // pred_fallthru
          _
        %s202 = smul.u32 4, %s21
        %p203 = scmp.lt.s32.totalorder %s202, 7
        %s204 = scalar_select %p203, %s202, 7
        %s205 = smul.addr %s204, 4
        %s206 = scalar_lea.vmem %s0, %s205
        %p207 = pneg %p50
        %p208 = pneg %p47
        %s209 = sand.u32 %s63, 1
        %s210 = scalar_lea.sflag [#allocation6], %s209
        %s211 = sand.u32 %s63, 1
        %s212 = smul.addr %s211, 256
        %s213 = scalar_lea.vmem [#allocation5], %s212
        %p214 = pneg %p76
        %p215 = pneg %p73
        %s216 = smul.u32 4, %s21
        %p217 = scmp.lt.s32.totalorder %s216, 7
        %s218 = scalar_select %p217, %s216, 7
        %s219 = smul.addr %s218, 8
        %s220 = scalar_lea.vmem %s2, %s219
        %p221 = pneg %p102
        %p222 = pneg %p99
        %p223 = pneg %p128
        %p224 = pneg %p125
        %s225 = smul.u32 4, %s21
        %p226 = scmp.lt.s32.totalorder %s225, 7
        %s227 = scalar_select %p226, %s225, 7
        %s228 = smul.addr %s227, 8
        %s229 = scalar_lea.vmem %s3, %s228
        %s230 = smul.u32 4, %s21
        %p231 = scmp.lt.s32.totalorder %s230, 7
        %s232 = scalar_select %p231, %s230, 7
        %s233 = smul.addr %s232, 4
        %s234 = scalar_lea.vmem %s0, %s233
        %s235 = smul.u32 4, %s21
        %s236 = smul.u32 4, %s22
        %s237 = smul.u32 4, %s21
        %p238 = scmp.lt.s32.totalorder %s237, 7
        %s239 = scalar_select %p238, %s237, 7
        %s240 = smul.addr %s239, 8
        %s241 = scalar_lea.vmem %s2, %s240
        %s242 = smul.u32 4, %s21
        %s243 = smul.u32 4, %s21
        %p244 = scmp.lt.s32.totalorder %s243, 7
        %s245 = scalar_select %p244, %s243, 7
        %s246 = smul.addr %s245, 8
        %s247 = scalar_lea.vmem %s3, %s246
        %s248 = smul.u32 4, %s21
        %p250 = scmp.eq.s32.totalorder %s22, 0
        // Predicated region
        $region37: #{tpu_custom_call.1} parent=31 // pred_check
          %p251 = pneg %p250
        $region38: #{tpu_custom_call.1} parent=31 // pred_check_branch
          %253 = sbr.rel (%p251) target = $region40
        $region39: #{tpu_custom_call.1} parent=31 // pred_region
          %vm254 = vcmask 7168
          %255 = vst.msk [vmem:[#allocation2] sm:$0xff] %vm254, -inf
          %256 = vst.msk [vmem:[#allocation2 + $0x8] sm:$0xff] %vm254, -inf
          %257 = vst.msk [vmem:[#allocation2 + $0x10] sm:$0xff] %vm254, -inf
          %258 = vst.msk [vmem:[#allocation2 + $0x18] sm:$0xff] %vm254, -inf
          %259 = vst.msk [vmem:[#allocation3] sm:$0xff] %vm254, 0.0
          %260 = vst.msk [vmem:[#allocation3 + $0x8] sm:$0xff] %vm254, 0.0
          %261 = vst.msk [vmem:[#allocation3 + $0x10] sm:$0xff] %vm254, 0.0
          %262 = vst.msk [vmem:[#allocation3 + $0x18] sm:$0xff] %vm254, 0.0
          %263 = vst.msk [vmem:[#allocation4] sm:$0xff] %vm254, 0.0
          %264 = vst.msk [vmem:[#allocation4 + $0x8] sm:$0xff] %vm254, 0.0
          %265 = vst.msk [vmem:[#allocation4 + $0x10] sm:$0xff] %vm254, 0.0
          %266 = vst.msk [vmem:[#allocation4 + $0x18] sm:$0xff] %vm254, 0.0
        $region40: #{tpu_custom_call.1} parent=31 // pred_fallthru
          _
        %v267 = vld [vmem:[%s234] sm:$0xf]
        %v268 = vld [vmem:[%s234 + $0x4] sm:$0xf]
        %v269 = vld [vmem:[%s234 + $0x8] sm:$0xf]
        %v270 = vld [vmem:[%s234 + $0xc] sm:$0xf]
        %v271 = vld [vmem:[%s197] sm:$0xff]
        %v272 = vld [vmem:[%s197 + $0x8] sm:$0xff]
        %v273 = vld [vmem:[%s197 + $0x10] sm:$0xff]
        %v274 = vld [vmem:[%s197 + $0x18] sm:$0xff]
        %v275 = vld [vmem:[%s197 + $0x20] sm:$0xff]
        %v276 = vld [vmem:[%s197 + $0x28] sm:$0xff]
        %v277 = vld [vmem:[%s197 + $0x30] sm:$0xff]
        %v278 = vld [vmem:[%s197 + $0x38] sm:$0xff]
        %v279 = vld [vmem:[%s197 + $0x40] sm:$0xff]
        %v280 = vld [vmem:[%s197 + $0x48] sm:$0xff]
        %v281 = vld [vmem:[%s197 + $0x50] sm:$0xff]
        %v282 = vld [vmem:[%s197 + $0x58] sm:$0xff]
        %v283 = vld [vmem:[%s197 + $0x60] sm:$0xff]
        %v284 = vld [vmem:[%s197 + $0x68] sm:$0xff]
        %v285 = vld [vmem:[%s197 + $0x70] sm:$0xff]
        %v286 = vld [vmem:[%s197 + $0x78] sm:$0xff]
        %v287 = vld [vmem:[%s197 + $0x80] sm:$0xff]
        %v288 = vld [vmem:[%s197 + $0x88] sm:$0xff]
        %v289 = vld [vmem:[%s197 + $0x90] sm:$0xff]
        %v290 = vld [vmem:[%s197 + $0x98] sm:$0xff]
        %v291 = vld [vmem:[%s197 + $0xa0] sm:$0xff]
        %v292 = vld [vmem:[%s197 + $0xa8] sm:$0xff]
        %v293 = vld [vmem:[%s197 + $0xb0] sm:$0xff]
        %v294 = vld [vmem:[%s197 + $0xb8] sm:$0xff]
        %v295 = vld [vmem:[%s197 + $0xc0] sm:$0xff]
        %v296 = vld [vmem:[%s197 + $0xc8] sm:$0xff]
        %v297 = vld [vmem:[%s197 + $0xd0] sm:$0xff]
        %v298 = vld [vmem:[%s197 + $0xd8] sm:$0xff]
        %v299 = vld [vmem:[%s197 + $0xe0] sm:$0xff]
        %v300 = vld [vmem:[%s197 + $0xe8] sm:$0xff]
        %v301 = vld [vmem:[%s197 + $0xf0] sm:$0xff]
        %v302 = vld [vmem:[%s197 + $0xf8] sm:$0xff]
        %v307 = vunpack.c.l.b16 %v267
        %v308 = vunpack.c.l.b16 %v268
        %v309 = vunpack.c.l.b16 %v269
        %v310 = vunpack.c.l.b16 %v270
        %v311 = vpack.c.b16 %v308, %v307
        %v312 = vpack.c.b16 %v310, %v309
        %v347 = vunpack.c.l.b16 %v271
        %v348 = vunpack.c.h.b16 %v271
        %v349 = vunpack.c.l.b16 %v272
        %v350 = vunpack.c.h.b16 %v272
        %v351 = vunpack.c.l.b16 %v273
        %v352 = vunpack.c.h.b16 %v273
        %v353 = vunpack.c.l.b16 %v274
        %v354 = vunpack.c.h.b16 %v274
        %v355 = vunpack.c.l.b16 %v275
        %v356 = vunpack.c.h.b16 %v275
        %v357 = vunpack.c.l.b16 %v276
        %v358 = vunpack.c.h.b16 %v276
        %v359 = vunpack.c.l.b16 %v277
        %v360 = vunpack.c.h.b16 %v277
        %v361 = vunpack.c.l.b16 %v278
        %v362 = vunpack.c.h.b16 %v278
        %v363 = vunpack.c.l.b16 %v279
        %v364 = vunpack.c.h.b16 %v279
        %v365 = vunpack.c.l.b16 %v280
        %v366 = vunpack.c.h.b16 %v280
        %v367 = vunpack.c.l.b16 %v281
        %v368 = vunpack.c.h.b16 %v281
        %v369 = vunpack.c.l.b16 %v282
        %v370 = vunpack.c.h.b16 %v282
        %v371 = vunpack.c.l.b16 %v283
        %v372 = vunpack.c.h.b16 %v283
        %v373 = vunpack.c.l.b16 %v284
        %v374 = vunpack.c.h.b16 %v284
        %v375 = vunpack.c.l.b16 %v285
        %v376 = vunpack.c.h.b16 %v285
        %v377 = vunpack.c.l.b16 %v286
        %v378 = vunpack.c.h.b16 %v286
        %v379 = vunpack.c.l.b16 %v287
        %v380 = vunpack.c.h.b16 %v287
        %v381 = vunpack.c.l.b16 %v288
        %v382 = vunpack.c.h.b16 %v288
        %v383 = vunpack.c.l.b16 %v289
        %v384 = vunpack.c.h.b16 %v289
        %v385 = vunpack.c.l.b16 %v290
        %v386 = vunpack.c.h.b16 %v290
        %v387 = vunpack.c.l.b16 %v291
        %v388 = vunpack.c.h.b16 %v291
        %v389 = vunpack.c.l.b16 %v292
        %v390 = vunpack.c.h.b16 %v292
        %v391 = vunpack.c.l.b16 %v293
        %v392 = vunpack.c.h.b16 %v293
        %v393 = vunpack.c.l.b16 %v294
        %v394 = vunpack.c.h.b16 %v294
        %v395 = vunpack.c.l.b16 %v295
        %v396 = vunpack.c.h.b16 %v295
        %v397 = vunpack.c.l.b16 %v296
        %v398 = vunpack.c.h.b16 %v296
        %v399 = vunpack.c.l.b16 %v297
        %v400 = vunpack.c.h.b16 %v297
        %v401 = vunpack.c.l.b16 %v298
        %v402 = vunpack.c.h.b16 %v298
        %v403 = vunpack.c.l.b16 %v299
        %v404 = vunpack.c.h.b16 %v299
        %v405 = vunpack.c.l.b16 %v300
        %v406 = vunpack.c.h.b16 %v300
        %v407 = vunpack.c.l.b16 %v301
        %v408 = vunpack.c.h.b16 %v301
        %v409 = vunpack.c.l.b16 %v302
        %v410 = vunpack.c.h.b16 %v302
        %v411 = vpack.c.b16 %v351, %v347
        %v412 = vpack.c.b16 %v352, %v348
        %v413 = vpack.c.b16 %v353, %v349
        %v414 = vpack.c.b16 %v354, %v350
        %v415 = vpack.c.b16 %v359, %v355
        %v416 = vpack.c.b16 %v360, %v356
        %v417 = vpack.c.b16 %v361, %v357
        %v418 = vpack.c.b16 %v362, %v358
        %v419 = vpack.c.b16 %v367, %v363
        %v420 = vpack.c.b16 %v368, %v364
        %v421 = vpack.c.b16 %v369, %v365
        %v422 = vpack.c.b16 %v370, %v366
        %v423 = vpack.c.b16 %v375, %v371
        %v424 = vpack.c.b16 %v376, %v372
        %v425 = vpack.c.b16 %v377, %v373
        %v426 = vpack.c.b16 %v378, %v374
        %v427 = vpack.c.b16 %v383, %v379
        %v428 = vpack.c.b16 %v384, %v380
        %v429 = vpack.c.b16 %v385, %v381
        %v430 = vpack.c.b16 %v386, %v382
        %v431 = vpack.c.b16 %v391, %v387
        %v432 = vpack.c.b16 %v392, %v388
        %v433 = vpack.c.b16 %v393, %v389
        %v434 = vpack.c.b16 %v394, %v390
        %v435 = vpack.c.b16 %v399, %v395
        %v436 = vpack.c.b16 %v400, %v396
        %v437 = vpack.c.b16 %v401, %v397
        %v438 = vpack.c.b16 %v402, %v398
        %v439 = vpack.c.b16 %v407, %v403
        %v440 = vpack.c.b16 %v408, %v404
        %v441 = vpack.c.b16 %v409, %v405
        %v442 = vpack.c.b16 %v410, %v406
        %475 = vmatprep.subr.bf16.mxu0 %v412
        %476 = vmatpush1.bf16.msra.mxu0 %v411
        %477 = vmatprep.subr.bf16.mxu0 %v416
        %478 = vmatpush1.bf16.msra.mxu0 %v415
        %479 = vmatprep.subr.bf16.mxu0 %v420
        %480 = vmatpush1.bf16.msra.mxu0 %v419
        %481 = vmatprep.subr.bf16.mxu0 %v424
        %482 = vmatpush1.bf16.msra.mxu0 %v423
        %483 = vmatprep.subr.bf16.mxu0 %v428
        %484 = vmatpush1.bf16.msra.mxu0 %v427
        %485 = vmatprep.subr.bf16.mxu0 %v432
        %486 = vmatpush1.bf16.msra.mxu0 %v431
        %487 = vmatprep.subr.bf16.mxu0 %v436
        %488 = vmatpush1.bf16.msra.mxu0 %v435
        %489 = vmatprep.subr.bf16.mxu0 %v440
        %490 = vmatpush1.bf16.msra.mxu0 %v439
        %491 = vmatprep.subr.bf16.mxu0 0
        %492 = vmatpush1.bf16.msra.mxu0 0
        %493 = vmatprep.subr.bf16.mxu0 0
        %494 = vmatpush1.bf16.msra.mxu0 0
        %495 = vmatprep.subr.bf16.mxu0 0
        %496 = vmatpush1.bf16.msra.mxu0 0
        %497 = vmatprep.subr.bf16.mxu0 0
        %498 = vmatpush1.bf16.msra.mxu0 0
        %499 = vmatprep.subr.bf16.mxu0 0
        %500 = vmatpush1.bf16.msra.mxu0 0
        %501 = vmatprep.subr.bf16.mxu0 0
        %502 = vmatpush1.bf16.msra.mxu0 0
        %503 = vmatprep.subr.bf16.mxu0 0
        %504 = vmatpush1.bf16.msra.mxu0 0
        %505 = vmatprep.subr.bf16.mxu0 0
        %506 = vmatpush1.bf16.msra.mxu0 0
        %507 = vmatprep.mubr.bf16.mxu0 0
        %508 = vmatmul.mubr.bf16.gmra.mrb[0].mxu0 %v311
        %v509 = vpop.f32.mrb[0].mxu0
        %v510 = vadd.f32 0.0, %v509
        %v511 = vpop.f32.mrb[0].mxu0
        %v512 = vadd.f32 0.0, %v511
        %v513 = vpop.f32.mrb[0].mxu0
        %v514 = vadd.f32 0.0, %v513
        %v515 = vpop.f32.mrb[0].mxu0
        %v516 = vadd.f32 0.0, %v515
        %517 = vmatprep.mubr.bf16.mxu0 0
        %518 = vmatmul.mubr.bf16.gmra.mrb[0].mxu0 %v312
        %v519 = vpop.f32.mrb[0].mxu0
        %v520 = vadd.f32 0.0, %v519
        %v521 = vpop.f32.mrb[0].mxu0
        %v522 = vadd.f32 0.0, %v521
        %v523 = vpop.f32.mrb[0].mxu0
        %v524 = vadd.f32 0.0, %v523
        %v525 = vpop.f32.mrb[0].mxu0
        %v526 = vadd.f32 0.0, %v525
        %527 = vdwg.mxu0
        %528 = vmatprep.subr.bf16.mxu0 %v414
        %529 = vmatpush1.bf16.msra.mxu0 %v413
        %530 = vmatprep.subr.bf16.mxu0 %v418
        %531 = vmatpush1.bf16.msra.mxu0 %v417
        %532 = vmatprep.subr.bf16.mxu0 %v422
        %533 = vmatpush1.bf16.msra.mxu0 %v421
        %534 = vmatprep.subr.bf16.mxu0 %v426
        %535 = vmatpush1.bf16.msra.mxu0 %v425
        %536 = vmatprep.subr.bf16.mxu0 %v430
        %537 = vmatpush1.bf16.msra.mxu0 %v429
        %538 = vmatprep.subr.bf16.mxu0 %v434
        %539 = vmatpush1.bf16.msra.mxu0 %v433
        %540 = vmatprep.subr.bf16.mxu0 %v438
        %541 = vmatpush1.bf16.msra.mxu0 %v437
        %542 = vmatprep.subr.bf16.mxu0 %v442
        %543 = vmatpush1.bf16.msra.mxu0 %v441
        %544 = vmatprep.subr.bf16.mxu0 0
        %545 = vmatpush1.bf16.msra.mxu0 0
        %546 = vmatprep.subr.bf16.mxu0 0
        %547 = vmatpush1.bf16.msra.mxu0 0
        %548 = vmatprep.subr.bf16.mxu0 0
        %549 = vmatpush1.bf16.msra.mxu0 0
        %550 = vmatprep.subr.bf16.mxu0 0
        %551 = vmatpush1.bf16.msra.mxu0 0
        %552 = vmatprep.subr.bf16.mxu0 0
        %553 = vmatpush1.bf16.msra.mxu0 0
        %554 = vmatprep.subr.bf16.mxu0 0
        %555 = vmatpush1.bf16.msra.mxu0 0
        %556 = vmatprep.subr.bf16.mxu0 0
        %557 = vmatpush1.bf16.msra.mxu0 0
        %558 = vmatprep.subr.bf16.mxu0 0
        %559 = vmatpush1.bf16.msra.mxu0 0
        %560 = vmatprep.mubr.bf16.mxu0 0
        %561 = vmatmul.mubr.bf16.gmra.mrb[0].mxu0 %v311
        %v562 = vpop.f32.mrb[0].mxu0
        %v563 = vadd.f32 0.0, %v562
        %v564 = vpop.f32.mrb[0].mxu0
        %v565 = vadd.f32 0.0, %v564
        %v566 = vpop.f32.mrb[0].mxu0
        %v567 = vadd.f32 0.0, %v566
        %v568 = vpop.f32.mrb[0].mxu0
        %v569 = vadd.f32 0.0, %v568
        %570 = vmatprep.mubr.bf16.mxu0 0
        %571 = vmatmul.mubr.bf16.gmra.mrb[0].mxu0 %v312
        %v572 = vpop.f32.mrb[0].mxu0
        %v573 = vadd.f32 0.0, %v572
        %v574 = vpop.f32.mrb[0].mxu0
        %v575 = vadd.f32 0.0, %v574
        %v576 = vpop.f32.mrb[0].mxu0
        %v577 = vadd.f32 0.0, %v576
        %v578 = vpop.f32.mrb[0].mxu0
        %v579 = vadd.f32 0.0, %v578
        %580 = vdwg.mxu0
        %v581 = vlaneseq
        %v582 = vand.u32 %v581, 127
        %v583 = vadd.s32 %v582, 128
        %v584 = vadd.s32 %v582, 256
        %v585 = vadd.s32 %v582, 384
        %p586 = scmp.eq.s32.totalorder %s22, 1
        // Predicated region
        $region41: #{tpu_custom_call.1} parent=31 // pred_check
          %p587 = pneg %p586
        $region42: #{tpu_custom_call.1} parent=31 // pred_check_branch
          %589 = sbr.rel (%p587) target = $region44
        $region43: #{tpu_custom_call.1} parent=31 // pred_region
          %vm590 = vcmp.lt.s32.totalorder %v582, 488
          %vm591 = vcmp.lt.s32.totalorder %v583, 488
          %vm592 = vcmp.lt.s32.totalorder %v584, 488
          %vm593 = vcmp.lt.s32.totalorder %v585, 488
          %v594 = vsel %vm590, %v510, -1e+30
          %v595 = vsel %vm591, %v512, -1e+30
          %v596 = vsel %vm592, %v563, -1e+30
          %v597 = vsel %vm593, %v565, -1e+30
          %v598 = vsel %vm590, %v514, -1e+30
          %v599 = vsel %vm591, %v516, -1e+30
          %v600 = vsel %vm592, %v567, -1e+30
          %v601 = vsel %vm593, %v569, -1e+30
          %v602 = vsel %vm590, %v520, -1e+30
          %v603 = vsel %vm591, %v522, -1e+30
          %v604 = vsel %vm592, %v573, -1e+30
          %v605 = vsel %vm593, %v575, -1e+30
          %v606 = vsel %vm590, %v524, -1e+30
          %v607 = vsel %vm591, %v526, -1e+30
          %v608 = vsel %vm592, %v577, -1e+30
          %v609 = vsel %vm593, %v579, -1e+30
        $region44: #{tpu_custom_call.1} parent=31 // pred_fallthru
          %v610 = vphi 0, %v594
          %v611 = vphi 0, %v595
          %v612 = vphi 0, %v596
          %v613 = vphi 0, %v597
          %v614 = vphi 0, %v598
          %v615 = vphi 0, %v599
          %v616 = vphi 0, %v600
          %v617 = vphi 0, %v601
          %v618 = vphi 0, %v602
          %v619 = vphi 0, %v603
          %v620 = vphi 0, %v604
          %v621 = vphi 0, %v605
          %v622 = vphi 0, %v606
          %v623 = vphi 0, %v607
          %v624 = vphi 0, %v608
          %v625 = vphi 0, %v609
        %p626 = pneg %p586
        // Predicated region
        $region45: #{tpu_custom_call.1} parent=31 // pred_check
          _
        $region46: #{tpu_custom_call.1} parent=31 // pred_check_branch
          %628 = sbr.rel (%p586) target = $region48
        $region47: #{tpu_custom_call.1} parent=31 // pred_region
          _
        $region48: #{tpu_custom_call.1} parent=31 // pred_fallthru
          %v629 = vphi %v610, %v510
          %v630 = vphi %v611, %v512
          %v631 = vphi %v612, %v563
          %v632 = vphi %v613, %v565
          %v633 = vphi %v614, %v514
          %v634 = vphi %v615, %v516
          %v635 = vphi %v616, %v567
          %v636 = vphi %v617, %v569
          %v637 = vphi %v618, %v520
          %v638 = vphi %v619, %v522
          %v639 = vphi %v620, %v573
          %v640 = vphi %v621, %v575
          %v641 = vphi %v622, %v524
          %v642 = vphi %v623, %v526
          %v643 = vphi %v624, %v577
          %v644 = vphi %v625, %v579
        %v645 = vld [vmem:[#allocation2] sm:$0xff]
        %v646 = vld [vmem:[#allocation2 + $0x8] sm:$0xff]
        %v647 = vld [vmem:[#allocation2 + $0x10] sm:$0xff]
        %v648 = vld [vmem:[#allocation2 + $0x18] sm:$0xff]
        %v649 = vmax.f32 %v629, %v630
        %v650 = vmax.f32 %v649, %v631
        %v651 = vmax.f32 %v650, %v632
        %652 = vmax.xlane.f32.xlu0 %v651
        %v653 = vpop.xlane.xlu0 %652
        %v654 = vmax.f32 %v633, %v634
        %v655 = vmax.f32 %v654, %v635
        %v656 = vmax.f32 %v655, %v636
        %657 = vmax.xlane.f32.xlu0 %v656
        %v658 = vpop.xlane.xlu0 %657
        %v659 = vmax.f32 %v637, %v638
        %v660 = vmax.f32 %v659, %v639
        %v661 = vmax.f32 %v660, %v640
        %662 = vmax.xlane.f32.xlu0 %v661
        %v663 = vpop.xlane.xlu0 %662
        %v664 = vmax.f32 %v641, %v642
        %v665 = vmax.f32 %v664, %v643
        %v666 = vmax.f32 %v665, %v644
        %667 = vmax.xlane.f32.xlu0 %v666
        %v668 = vpop.xlane.xlu0 %667
        %v669 = vmax.f32 %v645, %v653
        %v670 = vmax.f32 %v646, %v658
        %v671 = vmax.f32 %v647, %v663
        %v672 = vmax.f32 %v648, %v668
        %v673 = vsub.f32 %v645, %v669
        %v674 = vsub.f32 %v646, %v670
        %v675 = vsub.f32 %v647, %v671
        %v676 = vsub.f32 %v648, %v672
        %v677 = vmul.f32 %v673, 1.442695
        %v678 = vpow.pop %v677
        %v679 = vmul.f32 %v674, 1.442695
        %v680 = vpow.pop %v679
        %v681 = vmul.f32 %v675, 1.442695
        %v682 = vpow.pop %v681
        %v683 = vmul.f32 %v676, 1.442695
        %v684 = vpow.pop %v683
        %v685 = vld [vmem:[#allocation3] sm:$0xff]
        %v686 = vld [vmem:[#allocation3 + $0x8] sm:$0xff]
        %v687 = vld [vmem:[#allocation3 + $0x10] sm:$0xff]
        %v688 = vld [vmem:[#allocation3 + $0x18] sm:$0xff]
        %v689 = vmul.f32 %v678, %v685
        %v690 = vmul.f32 %v680, %v686
        %v691 = vmul.f32 %v682, %v687
        %v692 = vmul.f32 %v684, %v688
        %694 = vset.pattern.permute.xlu0 0
        %695 = vperm.xlu0 %694, %v669
        %v696 = vpop.permute.xlu0 %695
        %699 = vset.pattern.permute.xlu0 0
        %700 = vperm.xlu0 %699, %v670
        %v701 = vpop.permute.xlu0 %700
        %704 = vset.pattern.permute.xlu0 0
        %705 = vperm.xlu0 %704, %v671
        %v706 = vpop.permute.xlu0 %705
        %709 = vset.pattern.permute.xlu0 0
        %710 = vperm.xlu0 %709, %v672
        %v711 = vpop.permute.xlu0 %710
        %v713 = vsub.f32 %v629, %v696
        %v714 = vsub.f32 %v630, %v696
        %v715 = vsub.f32 %v631, %v696
        %v716 = vsub.f32 %v632, %v696
        %v717 = vsub.f32 %v633, %v701
        %v718 = vsub.f32 %v634, %v701
        %v719 = vsub.f32 %v635, %v701
        %v720 = vsub.f32 %v636, %v701
        %v721 = vsub.f32 %v637, %v706
        %v722 = vsub.f32 %v638, %v706
        %v723 = vsub.f32 %v639, %v706
        %v724 = vsub.f32 %v640, %v706
        %v725 = vsub.f32 %v641, %v711
        %v726 = vsub.f32 %v642, %v711
        %v727 = vsub.f32 %v643, %v711
        %v728 = vsub.f32 %v644, %v711
        %v729 = vmul.f32 %v713, 1.442695
        %v730 = vpow.pop %v729
        %v731 = vmul.f32 %v714, 1.442695
        %v732 = vpow.pop %v731
        %v733 = vmul.f32 %v715, 1.442695
        %v734 = vpow.pop %v733
        %v735 = vmul.f32 %v716, 1.442695
        %v736 = vpow.pop %v735
        %v737 = vmul.f32 %v717, 1.442695
        %v738 = vpow.pop %v737
        %v739 = vmul.f32 %v718, 1.442695
        %v740 = vpow.pop %v739
        %v741 = vmul.f32 %v719, 1.442695
        %v742 = vpow.pop %v741
        %v743 = vmul.f32 %v720, 1.442695
        %v744 = vpow.pop %v743
        %v745 = vmul.f32 %v721, 1.442695
        %v746 = vpow.pop %v745
        %v747 = vmul.f32 %v722, 1.442695
        %v748 = vpow.pop %v747
        %v749 = vmul.f32 %v723, 1.442695
        %v750 = vpow.pop %v749
        %v751 = vmul.f32 %v724, 1.442695
        %v752 = vpow.pop %v751
        %v753 = vmul.f32 %v725, 1.442695
        %v754 = vpow.pop %v753
        %v755 = vmul.f32 %v726, 1.442695
        %v756 = vpow.pop %v755
        %v757 = vmul.f32 %v727, 1.442695
        %v758 = vpow.pop %v757
        %v759 = vmul.f32 %v728, 1.442695
        %v760 = vpow.pop %v759
        %v761 = vadd.f32 %v730, %v732
        %v762 = vadd.f32 %v761, %v734
        %v763 = vadd.f32 %v762, %v736
        %764 = vadd.xlane.f32.xlu0 %v763
        %v765 = vpop.xlane.xlu0 %764
        %v766 = vadd.f32 %v738, %v740
        %v767 = vadd.f32 %v766, %v742
        %v768 = vadd.f32 %v767, %v744
        %769 = vadd.xlane.f32.xlu0 %v768
        %v770 = vpop.xlane.xlu0 %769
        %v771 = vadd.f32 %v746, %v748
        %v772 = vadd.f32 %v771, %v750
        %v773 = vadd.f32 %v772, %v752
        %774 = vadd.xlane.f32.xlu0 %v773
        %v775 = vpop.xlane.xlu0 %774
        %v776 = vadd.f32 %v754, %v756
        %v777 = vadd.f32 %v776, %v758
        %v778 = vadd.f32 %v777, %v760
        %779 = vadd.xlane.f32.xlu0 %v778
        %v780 = vpop.xlane.xlu0 %779
        %v781 = vadd.f32 %v689, %v765
        %v782 = vadd.f32 %v690, %v770
        %v783 = vadd.f32 %v691, %v775
        %v784 = vadd.f32 %v692, %v780
        %vm785 = vcmask 7168
        %786 = vst.msk [vmem:[#allocation3] sm:$0xff] %vm785, %v781
        %787 = vst.msk [vmem:[#allocation3 + $0x8] sm:$0xff] %vm785, %v782
        %788 = vst.msk [vmem:[#allocation3 + $0x10] sm:$0xff] %vm785, %v783
        %789 = vst.msk [vmem:[#allocation3 + $0x18] sm:$0xff] %vm785, %v784
        %790 = vst.msk [vmem:[#allocation2] sm:$0xff] %vm785, %v669
        %791 = vst.msk [vmem:[#allocation2 + $0x8] sm:$0xff] %vm785, %v670
        %792 = vst.msk [vmem:[#allocation2 + $0x10] sm:$0xff] %vm785, %v671
        %793 = vst.msk [vmem:[#allocation2 + $0x18] sm:$0xff] %vm785, %v672
        %v794 = vld [vmem:[%s241] sm:$0xff]
        %v795 = vld [vmem:[%s241 + $0x8] sm:$0xff]
        %v796 = vld [vmem:[%s241 + $0x10] sm:$0xff]
        %v797 = vld [vmem:[%s241 + $0x18] sm:$0xff]
        %s798 = smul.u32 %s22, 512
        %v799 = vstv %s798
        %v800 = vsub.s32 %v794, %v799
        %v801 = vsub.s32 %v795, %v799
        %v802 = vsub.s32 %v796, %v799
        %v803 = vsub.s32 %v797, %v799
        %v804 = vld [vmem:[#allocation4] sm:$0xff]
        %v805 = vld [vmem:[#allocation4 + $0x8] sm:$0xff]
        %v806 = vld [vmem:[#allocation4 + $0x10] sm:$0xff]
        %v807 = vld [vmem:[#allocation4 + $0x18] sm:$0xff]
        %808 = vset.pattern.permute.xlu0 0
        %809 = vperm.xlu0 %808, %v800
        %v810 = vpop.permute.xlu0 %809
        %811 = vset.pattern.permute.xlu0 0
        %812 = vperm.xlu0 %811, %v801
        %v813 = vpop.permute.xlu0 %812
        %814 = vset.pattern.permute.xlu0 0
        %815 = vperm.xlu0 %814, %v802
        %v816 = vpop.permute.xlu0 %815
        %817 = vset.pattern.permute.xlu0 0
        %818 = vperm.xlu0 %817, %v803
        %v819 = vpop.permute.xlu0 %818
        %vm820 = vcmp.eq.s32.totalorder %v582, %v810
        %vm821 = vcmp.eq.s32.totalorder %v583, %v810
        %vm822 = vcmp.eq.s32.totalorder %v584, %v810
        %vm823 = vcmp.eq.s32.totalorder %v585, %v810
        %vm824 = vcmp.eq.s32.totalorder %v582, %v813
        %vm825 = vcmp.eq.s32.totalorder %v583, %v813
        %vm826 = vcmp.eq.s32.totalorder %v584, %v813
        %vm827 = vcmp.eq.s32.totalorder %v585, %v813
        %vm828 = vcmp.eq.s32.totalorder %v582, %v816
        %vm829 = vcmp.eq.s32.totalorder %v583, %v816
        %vm830 = vcmp.eq.s32.totalorder %v584, %v816
        %vm831 = vcmp.eq.s32.totalorder %v585, %v816
        %vm832 = vcmp.eq.s32.totalorder %v582, %v819
        %vm833 = vcmp.eq.s32.totalorder %v583, %v819
        %vm834 = vcmp.eq.s32.totalorder %v584, %v819
        %vm835 = vcmp.eq.s32.totalorder %v585, %v819
        %v836 = vsel %vm820, %v629, 0.0
        %v837 = vsel %vm821, %v630, 0.0
        %v838 = vsel %vm822, %v631, 0.0
        %v839 = vsel %vm823, %v632, 0.0
        %v840 = vsel %vm824, %v633, 0.0
        %v841 = vsel %vm825, %v634, 0.0
        %v842 = vsel %vm826, %v635, 0.0
        %v843 = vsel %vm827, %v636, 0.0
        %v844 = vsel %vm828, %v637, 0.0
        %v845 = vsel %vm829, %v638, 0.0
        %v846 = vsel %vm830, %v639, 0.0
        %v847 = vsel %vm831, %v640, 0.0
        %v848 = vsel %vm832, %v641, 0.0
        %v849 = vsel %vm833, %v642, 0.0
        %v850 = vsel %vm834, %v643, 0.0
        %v851 = vsel %vm835, %v644, 0.0
        %v852 = vadd.f32 %v836, %v837
        %v853 = vadd.f32 %v852, %v838
        %v854 = vadd.f32 %v853, %v839
        %855 = vadd.xlane.f32.xlu0 %v854
        %v856 = vpop.xlane.xlu0 %855
        %v857 = vadd.f32 %v840, %v841
        %v858 = vadd.f32 %v857, %v842
        %v859 = vadd.f32 %v858, %v843
        %860 = vadd.xlane.f32.xlu0 %v859
        %v861 = vpop.xlane.xlu0 %860
        %v862 = vadd.f32 %v844, %v845
        %v863 = vadd.f32 %v862, %v846
        %v864 = vadd.f32 %v863, %v847
        %865 = vadd.xlane.f32.xlu0 %v864
        %v866 = vpop.xlane.xlu0 %865
        %v867 = vadd.f32 %v848, %v849
        %v868 = vadd.f32 %v867, %v850
        %v869 = vadd.f32 %v868, %v851
        %870 = vadd.xlane.f32.xlu0 %v869
        %v871 = vpop.xlane.xlu0 %870
        %v872 = vadd.f32 %v804, %v856
        %v873 = vadd.f32 %v805, %v861
        %v874 = vadd.f32 %v806, %v866
        %v875 = vadd.f32 %v807, %v871
        %876 = vst.msk [vmem:[#allocation4] sm:$0xff] %vm785, %v872
        %877 = vst.msk [vmem:[#allocation4 + $0x8] sm:$0xff] %vm785, %v873
        %878 = vst.msk [vmem:[#allocation4 + $0x10] sm:$0xff] %vm785, %v874
        %879 = vst.msk [vmem:[#allocation4 + $0x18] sm:$0xff] %vm785, %v875
        // Predicated region
        $region49: #{tpu_custom_call.1} parent=31 // pred_check
          %p880 = pneg %p586
        $region50: #{tpu_custom_call.1} parent=31 // pred_check_branch
          %882 = sbr.rel (%p880) target = $region52
        $region51: #{tpu_custom_call.1} parent=31 // pred_region
          %v883 = vld [vmem:[#allocation2] sm:$0xff]
          %v884 = vld [vmem:[#allocation2 + $0x8] sm:$0xff]
          %v885 = vld [vmem:[#allocation2 + $0x10] sm:$0xff]
          %v886 = vld [vmem:[#allocation2 + $0x18] sm:$0xff]
          %v887 = vld [vmem:[#allocation3] sm:$0xff]
          %v888 = vld [vmem:[#allocation3 + $0x8] sm:$0xff]
          %v889 = vld [vmem:[#allocation3 + $0x10] sm:$0xff]
          %v890 = vld [vmem:[#allocation3 + $0x18] sm:$0xff]
          %v891 = vlog2.pop %v887
          %v892 = vmul.f32 %v891, 0.6931472
          %v893 = vlog2.pop %v888
          %v894 = vmul.f32 %v893, 0.6931472
          %v895 = vlog2.pop %v889
          %v896 = vmul.f32 %v895, 0.6931472
          %v897 = vlog2.pop %v890
          %v898 = vmul.f32 %v897, 0.6931472
          %v899 = vadd.f32 %v883, %v892
          %v900 = vadd.f32 %v884, %v894
          %v901 = vadd.f32 %v885, %v896
          %v902 = vadd.f32 %v886, %v898
          %v903 = vld [vmem:[#allocation4] sm:$0xff]
          %v904 = vld [vmem:[#allocation4 + $0x8] sm:$0xff]
          %v905 = vld [vmem:[#allocation4 + $0x10] sm:$0xff]
          %v906 = vld [vmem:[#allocation4 + $0x18] sm:$0xff]
          %v907 = vsub.f32 %v899, %v903
          %v908 = vsub.f32 %v900, %v904
          %v909 = vsub.f32 %v901, %v905
          %v910 = vsub.f32 %v902, %v906
          %911 = vst.msk [vmem:[%s247] sm:$0xff] %vm785, %v907
          %912 = vst.msk [vmem:[%s247 + $0x8] sm:$0xff] %vm785, %v908
          %913 = vst.msk [vmem:[%s247 + $0x10] sm:$0xff] %vm785, %v909
          %914 = vst.msk [vmem:[%s247 + $0x18] sm:$0xff] %vm785, %v910
        $region52: #{tpu_custom_call.1} parent=31 // pred_fallthru
          _
        %s915 = smul.u32 4, %s21
        %p916 = scmp.lt.s32.totalorder %s915, 7
        %s917 = scalar_select %p916, %s915, 7
        %s918 = smul.addr %s917, 8
        %s919 = scalar_lea.vmem %s3, %s918
        // Predicated region
        $region53: #{tpu_custom_call.1} parent=31 // pred_check
          %p920 = pneg %p125
        $region54: #{tpu_custom_call.1} parent=31 // pred_check_branch
          %922 = sbr.rel (%p920) target = $region56
        $region55: #{tpu_custom_call.1} parent=31 // pred_region
          %s923 = smul.u32 4, %s21
        $region56: #{tpu_custom_call.1} parent=31 // pred_fallthru
          _
      $region32: #{tpu_custom_call.1} parent=5 // pred_fallthru
        _
      %p924 = scmp.le.s32.totalorder 2, %s12
      // Predicated region
      $region57: #{tpu_custom_call.1} parent=5 // pred_check
        %p925 = pneg %p924
      $region58: #{tpu_custom_call.1} parent=5 // pred_check_branch
        %927 = sbr.rel (%p925) target = $region60
      $region59: #{tpu_custom_call.1} parent=5 // pred_region
        %s928 = ssub.s32 %s12, 2
        // Predicated region
        $region61: #{tpu_custom_call.1} parent=59 // pred_check
          %p929 = pneg %p131
        $region62: #{tpu_custom_call.1} parent=59 // pred_check_branch
          %931 = sbr.rel (%p929) target = $region64
        $region63: #{tpu_custom_call.1} parent=59 // pred_region
          %s932 = smul.u32 4, %s23
          %p933 = scmp.lt.s32.totalorder %s932, 7
          %s934 = scalar_select %p933, %s932, 7
          %s935 = smul.addr %s934, 8
          %s936 = scalar_lea.vmem %s3, %s935
        $region64: #{tpu_custom_call.1} parent=59 // pred_fallthru
          _
      $region60: #{tpu_custom_call.1} parent=5 // pred_fallthru
        _
    $region6: #{tpu_custom_call.1} parent=1 // loop_footer
      %s16 = sadd.s32 1, %s12
    $region7: #{tpu_custom_call.1} parent=1 // loop_footer_branch
      %11 = sbr.rel target = $region3
    $region8: #{tpu_custom_call.1} parent=1 // loop_exit
      _
    %937 = vsyncpa [#allocation6], 1
    %s938 = scalar_lea.sflag [#allocation6], 1
    %939 = vsyncpa %s938, 1

</llo_original>
